<compile_context>
chip_gen: v6e
topology: v6e:2x2x1
jax: 0.10.0
libtpu: 0.0.40
codegen_flags: <defaults>
</compile_context>

<pallas_src>
import jax
import jax.numpy as jnp
from jax.experimental import pallas as pl
from jax.experimental.pallas import tpu as pltpu


# --------------------------------- kernel -----------------------------------

def _fused_linear_kernel(xT_ref, wcb_ref, out_ref, probs_ref):
    # xT_ref:    (D, TILE_N)   data tile; features on sublanes, samples on lanes
    # wcb_ref:   (RC, D + 1)   fused per-(ray,class) weights; last column = bias
    # out_ref:   (RC, TILE_N)  logits, lane-dense
    # probs_ref: (RC, TILE_N)  sigmoid(logits), lane-dense
    d_in = xT_ref.shape[0]
    w = wcb_ref[...]                                   # tiny, resident in VMEM

    # Accumulator starts at the bias (lane-broadcast of last column), f32.
    acc = jnp.broadcast_to(w[:, d_in:d_in + 1], out_ref.shape).astype(jnp.float32)

    # D=4 unrolled VPU multiply-adds; no MXU for a K=4 contraction.
    for d in range(d_in):
        acc = acc + w[:, d:d + 1] * xT_ref[d:d + 1, :]

    out_ref[...] = acc.astype(out_ref.dtype)
    # sigmoid(x) == 0.5 * tanh(0.5 * x) + 0.5  -> single EUP push.
    probs_ref[...] = (0.5 * jnp.tanh(0.5 * acc) + 0.5).astype(probs_ref.dtype)


# ------------------------------ tiling policy --------------------------------

def _round_up(a, b):
    return (a + b - 1) // b * b


def _choose_tiling(n, rc, d_in, out_itemsize, *,
                   target_step_bytes=2 << 20, vmem_budget_bytes=8 << 20):
    """Pick (tile_n, n_pad) as a function of RC, a per-step byte target and a
    VMEM budget (v7x-safe), guaranteeing >=2 grid steps once n_pad >= 256 and
    minimizing padding waste."""
    n128 = _round_up(max(n, 1), 128)
    rc_pad = _round_up(max(rc, 1), 8)

    # Double-buffered per-column VMEM cost: 2 outputs x 2 buffers + x tile x 2.
    vmem_per_col = 2 * 2 * rc_pad * out_itemsize + 2 * d_in * 4
    tile_cap = max(128, (vmem_budget_bytes // vmem_per_col) // 128 * 128)

    # Amortize the ~0.35us fixed per-step overhead: >= target bytes written/step.
    out_bytes_per_col = 2 * rc_pad * out_itemsize
    tile_target = max(128, (target_step_bytes // out_bytes_per_col) // 128 * 128)

    # Force >= 2 grid steps when there is enough data (pipeline + v7x 2 TCs).
    pipeline_cap = max(128, (n128 // 2) // 128 * 128) if n128 >= 256 else 128

    tile = min(tile_target, tile_cap, pipeline_cap)

    # Minimize padded total among multiples of 128 in [tile/2, tile].
    best_tile, best_pad = tile, _round_up(n128, tile)
    t = tile - 128
    while t >= max(128, tile // 2):
        pad = _round_up(n128, t)
        if pad < best_pad:
            best_tile, best_pad = t, pad
        t -= 128
    return best_tile, best_pad


# --------------------------------- wrapper -----------------------------------

def hypernet_forward_pallas(x, Wc, bc, *, out_dtype=jnp.float32,
                            target_step_bytes=2 << 20,
                            vmem_budget_bytes=8 << 20):
    """x: (N, D); Wc: (R, C, D); bc: (R, C).

    Returns (out, probs) in the kernel-native (R, C, N) layout (no transpose
    here — consumers needing (N, C) transpose per-ray, or keep native layout).
    Set out_dtype=jnp.bfloat16 to halve output HBM traffic if numerics allow.
    """
    N, D = x.shape
    R, C, _ = Wc.shape
    RC = R * C
    itemsize = jnp.dtype(out_dtype).itemsize

    tile_n, n_pad = _choose_tiling(
        N, RC, D, itemsize,
        target_step_bytes=target_step_bytes,
        vmem_budget_bytes=vmem_budget_bytes)

    # x transposed so samples live on the lane axis; zero-pad extra columns.
    xT = jnp.zeros((D, n_pad), jnp.float32).at[:, :N].set(x.astype(jnp.float32).T)

    # Pack fused weights + bias into one small resident tensor: (RC, D + 1).
    wcb = jnp.concatenate(
        [Wc.reshape(RC, D), bc.reshape(RC, 1)], axis=1).astype(jnp.float32)

    grid = (n_pad // tile_n,)

    cost = pl.CostEstimate(
        flops=(2 * D + 1) * RC * n_pad,                        # FMAs + bias add
        transcendentals=RC * n_pad,                            # one tanh per elem
        bytes_accessed=(D * n_pad * 4 + RC * (D + 1) * 4       # reads
                        + 2 * RC * n_pad * itemsize),          # writes
    )

    out_cn, probs_cn = pl.pallas_call(
        _fused_linear_kernel,
        out_shape=(
            jax.ShapeDtypeStruct((RC, n_pad), out_dtype),      # logits
            jax.ShapeDtypeStruct((RC, n_pad), out_dtype),      # sigmoid probs
        ),
        grid=grid,
        in_specs=[
            pl.BlockSpec((D, tile_n), lambda n: (0, n)),       # streamed x tile
            pl.BlockSpec((RC, D + 1), lambda n: (0, 0)),       # resident weights
        ],
        out_specs=(
            pl.BlockSpec((RC, tile_n), lambda n: (0, n)),
            pl.BlockSpec((RC, tile_n), lambda n: (0, n)),
        ),
        compiler_params=pltpu.CompilerParams(
            dimension_semantics=("parallel",),
            vmem_limit_bytes=32 * 1024 * 1024),
        cost_estimate=cost,
    )(xT, wcb)

    out = out_cn[:, :N].reshape(R, C, N)       # kernel-native layout, no extra
    probs = probs_cn[:, :N].reshape(R, C, N)   # HBM round-trip here
    return out, probs


# ----------------------------- parameter setup ------------------------------

def _init_linear(key, out_f, in_f):
    """PyTorch nn.Linear-style init: U(-1/sqrt(in), 1/sqrt(in))."""
    k_w, k_b = jax.random.split(key)
    bound = 1.0 / float(in_f) ** 0.5
    w = jax.random.uniform(k_w, (out_f, in_f), jnp.float32, -bound, bound)
    b = jax.random.uniform(k_b, (out_f,), jnp.float32, -bound, bound)
    return w, b


def init_hypernet_params(key, n_obj, num_classes):
    keys = jax.random.split(key, 6)
    p = {}
    p["rm1_w"], p["rm1_b"] = _init_linear(keys[0], 4, n_obj)            # ray_mlp[0]
    p["rm2_w"], p["rm2_b"] = _init_linear(keys[1], 4, 4)                # ray_mlp[2]
    p["fc1_w"], p["fc1_b"] = _init_linear(keys[2], 4 * 4, 4)            # fc1
    p["bias1_w"], p["bias1_b"] = _init_linear(keys[3], 4, 4)            # bias1
    p["fc2_w"], p["fc2_b"] = _init_linear(keys[4], num_classes * 4, 4)  # fc2
    p["bias2_w"], p["bias2_b"] = _init_linear(keys[5], 1, 4)            # bias2
    return p


def generate_ray_weights(p, ray, num_classes):
    """Plain-JAX hypernetwork (tiny matmuls that *generate* the per-ray weights)."""
    h = jnp.maximum(ray @ p["rm1_w"].T + p["rm1_b"], 0.0)         # Linear -> ReLU
    features = h @ p["rm2_w"].T + p["rm2_b"]                      # -> Linear, (R, 4)

    R = features.shape[0]
    W1 = (features @ p["fc1_w"].T + p["fc1_b"]).reshape(R, 4, 4)  # (R, 4, 4)
    b1 = features @ p["bias1_w"].T + p["bias1_b"]                 # (R, 4)
    W2 = (features @ p["fc2_w"].T + p["fc2_b"]).reshape(R, num_classes, 4)
    b2 = features @ p["bias2_w"].T + p["bias2_b"]                 # (R, 1)
    return W1, b1, W2, b2


def fuse_ray_weights(W1, b1, W2, b2):
    """Fold the two generated linears into one: out = x @ Wc.T + bc."""
    Wc = jnp.einsum("rcj,rjd->rcd", W2, W1)           # (R, C, 4)
    bc = jnp.einsum("rcj,rj->rc", W2, b1) + b2        # (R, C); b2 (R,1) bcasts
    return Wc, bc


def hypernet_apply(p, ray, x, num_classes, idx=None, *, native_layout=False,
                   out_dtype=jnp.float32):
    """Reproduces Hypernet.forward: returns (Probs, Out) dicts.

    native_layout=False -> dict values are (N, C) like PyTorch (per-ray
    transpose applied lazily here).  native_layout=True -> dict values are the
    kernel-native (C, N) slabs, skipping the transpose entirely.
    """
    W1, b1, W2, b2 = generate_ray_weights(p, ray, num_classes)
    Wc, bc = fuse_ray_weights(W1, b1, W2, b2)
    out_native, probs_native = hypernet_forward_pallas(x, Wc, bc, out_dtype=out_dtype)
    Probs, Out = {}, {}
    for r in range(ray.shape[0]):
        key = r if idx is None else idx  # matches the PyTorch dict-key behavior
        if native_layout:
            Probs[key] = probs_native[r]        # (C, N)
            Out[key] = out_native[r]
        else:
            Probs[key] = probs_native[r].T      # (N, C) — PyTorch layout
            Out[key] = out_native[r].T
    return Probs, Out


# --------------------------------- reference ---------------------------------

def hypernet_ref(p, ray, x, num_classes):
    W1, b1, W2, b2 = generate_ray_weights(p, ray, num_classes)
    outs, probs = [], []
    for r in range(ray.shape[0]):
        x1 = x @ W1[r].T + b1[r]
        o = x1 @ W2[r].T + b2[r]          # b2[r] has shape (1,), broadcasts
        outs.append(o)
        probs.append(jax.nn.sigmoid(o))
    return jnp.stack(probs), jnp.stack(outs)


if __name__ == "__main__":
    n_obj = 2
    num_classes = 3
    num_rays = 2
    D = 4          # x feature dim must be 4 (fc1 generates a (4,4) weight)

    key = jax.random.PRNGKey(0)
    k_params, k_ray, k_x = jax.random.split(key, 3)

    params = init_hypernet_params(k_params, n_obj, num_classes)
    ray = jax.random.uniform(k_ray, (num_rays, n_obj), jnp.float32)
    ray = ray / jnp.sum(ray, axis=-1, keepdims=True)   # rays on the simplex

    ok = True
    for N in (8, 384):   # 384 -> n_pad=384, tile=128, 3 grid steps (pipelined)
        x = jax.random.normal(jax.random.fold_in(k_x, N), (N, D), jnp.float32)

        Probs, Out = hypernet_apply(params, ray, x, num_classes)
        jax.block_until_ready(Out[num_rays - 1])

        # correctness check against pure-JAX (unfused, two-matmul) reference
        probs_ref, out_ref = hypernet_ref(params, ray, x, num_classes)
        for r in range(num_rays):
            ok &= bool(jnp.allclose(Out[r], out_ref[r], atol=1e-5, rtol=1e-5))
            ok &= bool(jnp.allclose(Probs[r], probs_ref[r], atol=1e-5, rtol=1e-5))

    assert ok
    print("KERNEL_OK")
</pallas_src>

<mosaic_0001>
module attributes {stable_mosaic.version = 11 : i64} {
  func.func @_fused_linear_kernel(%arg0: i32, %arg1: memref<4x128xf32, #tpu.memory_space<vmem>>, %arg2: memref<6x5xf32, #tpu.memory_space<vmem>>, %arg3: memref<6x128xf32, #tpu.memory_space<vmem>>, %arg4: memref<6x128xf32, #tpu.memory_space<vmem>>) attributes {dimension_semantics = [#tpu.dimension_semantics<parallel>], iteration_bounds = array<i64: 1>, scalar_prefetch = 0 : i64, scratch_operands = 0 : i64, tpu.core_type = #tpu.core_type<tc>, window_params = [{transform_indices = @transform_0, window_bounds = array<i64: 4, 128>}, {pipeline_mode = #tpu.pipeline_mode<synchronous>, transform_indices = @transform_1, window_bounds = array<i64: 6, 5>}, {transform_indices = @transform_2, window_bounds = array<i64: 6, 128>}, {transform_indices = @transform_3, window_bounds = array<i64: 6, 128>}]} {
    %c0 = arith.constant 0 : index
    %c0_0 = arith.constant 0 : index
    %0 = vector.load %arg2[%c0, %c0_0] : memref<6x5xf32, #tpu.memory_space<vmem>>, vector<6x5xf32>
    %1 = vector.extract_strided_slice %0 {offsets = [0, 4], sizes = [6, 1], strides = [1, 1]} : vector<6x5xf32> to vector<6x1xf32>
    %2 = vector.shape_cast %1 : vector<6x1xf32> to vector<6x1xf32>
    %3 = vector.broadcast %2 : vector<6x1xf32> to vector<6x128xf32>
    %4 = vector.extract_strided_slice %0 {offsets = [0, 0], sizes = [6, 1], strides = [1, 1]} : vector<6x5xf32> to vector<6x1xf32>
    %c0_1 = arith.constant 0 : index
    %c0_2 = arith.constant 0 : index
    %5 = vector.load %arg1[%c0_1, %c0_2] : memref<4x128xf32, #tpu.memory_space<vmem>>, vector<1x128xf32>
    %6 = vector.broadcast %4 : vector<6x1xf32> to vector<6x128xf32>
    %7 = vector.broadcast %5 : vector<1x128xf32> to vector<6x128xf32>
    %8 = arith.mulf %6, %7 : vector<6x128xf32>
    %9 = arith.addf %3, %8 : vector<6x128xf32>
    %10 = vector.extract_strided_slice %0 {offsets = [0, 1], sizes = [6, 1], strides = [1, 1]} : vector<6x5xf32> to vector<6x1xf32>
    %c1 = arith.constant 1 : index
    %c0_3 = arith.constant 0 : index
    %11 = vector.load %arg1[%c1, %c0_3] : memref<4x128xf32, #tpu.memory_space<vmem>>, vector<1x128xf32>
    %12 = vector.broadcast %10 : vector<6x1xf32> to vector<6x128xf32>
    %13 = vector.broadcast %11 : vector<1x128xf32> to vector<6x128xf32>
    %14 = arith.mulf %12, %13 : vector<6x128xf32>
    %15 = arith.addf %9, %14 : vector<6x128xf32>
    %16 = vector.extract_strided_slice %0 {offsets = [0, 2], sizes = [6, 1], strides = [1, 1]} : vector<6x5xf32> to vector<6x1xf32>
    %c2 = arith.constant 2 : index
    %c0_4 = arith.constant 0 : index
    %17 = vector.load %arg1[%c2, %c0_4] : memref<4x128xf32, #tpu.memory_space<vmem>>, vector<1x128xf32>
    %18 = vector.broadcast %16 : vector<6x1xf32> to vector<6x128xf32>
    %19 = vector.broadcast %17 : vector<1x128xf32> to vector<6x128xf32>
    %20 = arith.mulf %18, %19 : vector<6x128xf32>
    %21 = arith.addf %15, %20 : vector<6x128xf32>
    %22 = vector.extract_strided_slice %0 {offsets = [0, 3], sizes = [6, 1], strides = [1, 1]} : vector<6x5xf32> to vector<6x1xf32>
    %c3 = arith.constant 3 : index
    %c0_5 = arith.constant 0 : index
    %23 = vector.load %arg1[%c3, %c0_5] : memref<4x128xf32, #tpu.memory_space<vmem>>, vector<1x128xf32>
    %24 = vector.broadcast %22 : vector<6x1xf32> to vector<6x128xf32>
    %25 = vector.broadcast %23 : vector<1x128xf32> to vector<6x128xf32>
    %26 = arith.mulf %24, %25 : vector<6x128xf32>
    %27 = arith.addf %21, %26 : vector<6x128xf32>
    %c0_6 = arith.constant 0 : index
    %c0_7 = arith.constant 0 : index
    %28 = vector.load %arg3[%c0_6, %c0_7] : memref<6x128xf32, #tpu.memory_space<vmem>>, vector<6x128xf32>
    tpu.vector_store %arg3[%c0_6, %c0_7], %27 {strides = array<i32>} : memref<6x128xf32, #tpu.memory_space<vmem>>, vector<6x128xf32>,
    %cst = arith.constant 5.000000e-01 : f32
    %29 = vector.broadcast %cst : f32 to vector<6x128xf32>
    %30 = arith.mulf %29, %27 : vector<6x128xf32>
    %31 = math.tanh %30 : vector<6x128xf32>
    %cst_8 = arith.constant 5.000000e-01 : f32
    %32 = vector.broadcast %cst_8 : f32 to vector<6x128xf32>
    %33 = arith.mulf %32, %31 : vector<6x128xf32>
    %cst_9 = arith.constant 5.000000e-01 : f32
    %34 = vector.broadcast %cst_9 : f32 to vector<6x128xf32>
    %35 = arith.addf %33, %34 : vector<6x128xf32>
    %c0_10 = arith.constant 0 : index
    %c0_11 = arith.constant 0 : index
    %36 = vector.load %arg4[%c0_10, %c0_11] : memref<6x128xf32, #tpu.memory_space<vmem>>, vector<6x128xf32>
    tpu.vector_store %arg4[%c0_10, %c0_11], %35 {strides = array<i32>} : memref<6x128xf32, #tpu.memory_space<vmem>>, vector<6x128xf32>,
    return
  }
  func.func @transform_0(%arg0: i32) -> (i32, i32) {
    %c0_i32 = arith.constant 0 : i32
    %c0_i32_0 = arith.constant 0 : i32
    return %c0_i32, %arg0 : i32, i32
  }
  func.func @transform_1(%arg0: i32) -> (i32, i32) {
    %c0_i32 = arith.constant 0 : i32
    %c0_i32_0 = arith.constant 0 : i32
    %c0_i32_1 = arith.constant 0 : i32
    return %c0_i32, %c0_i32_0 : i32, i32
  }
  func.func @transform_2(%arg0: i32) -> (i32, i32) {
    %c0_i32 = arith.constant 0 : i32
    %c0_i32_0 = arith.constant 0 : i32
    return %c0_i32, %arg0 : i32, i32
  }
  func.func @transform_3(%arg0: i32) -> (i32, i32) {
    %c0_i32 = arith.constant 0 : i32
    %c0_i32_0 = arith.constant 0 : i32
    return %c0_i32, %arg0 : i32, i32
  }
}

</mosaic_0001>

<llo_original>
// kernel: tpu_custom_call.1
$region0: #{tpu_custom_call.1}
  #allocation0 [shape = 'u32[]', space=smem, size = 0x4, offset = 0x4, fixed_abs, tag = 'smem constant byte address 0x4 - core index']
  #allocation1 [shape = 'u32[144,128]{1,0:T(1,128)}', space=vmem, size = 0x12000, scoped, tag = 'internal scratch']
  %s0 = inlined_call_operand.hbm [shape: f32[4,128], index: 0, kind: input, shape index: {}]
  %s1 = inlined_call_operand.hbm [shape: f32[6,5], index: 1, kind: input, shape index: {}]
  %s2 = inlined_call_operand.hbm [shape: f32[6,128], index: 2, kind: output, shape index: {0}]
  %s3 = inlined_call_operand.hbm [shape: f32[6,128], index: 3, kind: output, shape index: {1}]
  %4 = xla_tuple %s2, %s3
  %s5 = sld [smem:[#allocation0]]
  $region34: #{tpu_custom_call.1} parent=0
    _
  %s7 = ssub.s32 1, %s5
  %s8 = scalar_select 0, %s7, %s5
  $region1: #{tpu_custom_call.1} parent=0
    #allocation2 [shape = 'u8[2048]{0}', space=vmem, size = 0x800, scoped, tag = 'input window, operand 0, single buffered']
    #allocation3 [shape = 's32[1]{0}', space=sflag, size = 0x4, scoped, tag = 'scoped memory for tpu_custom_call.1']
    #allocation4 [shape = 's32[1]{0}', space=sflag, size = 0x4, scoped, tag = 'scoped memory for tpu_custom_call.1']
    #allocation5 [shape = 'u8[4096]{0}', space=vmem, size = 0x1000, scoped, tag = 'input window, operand 1, single buffered']
    #allocation6 [shape = 's32[1]{0}', space=sflag, size = 0x4, scoped, tag = 'scoped memory for tpu_custom_call.1']
    #allocation7 [shape = 'u8[4096]{0}', space=vmem, size = 0x1000, scoped, tag = 'output window, operand 0, single buffered']
    #allocation8 [shape = 'u8[4096]{0}', space=vmem, size = 0x1000, scoped, tag = 'output window, operand 1, single buffered']
    #allocation9 [shape = 's32[1]{0}', space=sflag, size = 0x4, scoped, tag = 'scoped memory for tpu_custom_call.1']
    %9 = vsyncpa [#allocation3], 0
    %10 = vsyncpa [#allocation6], 0
    %11 = vsyncpa [#allocation4], 0
    %12 = vsyncpa [#allocation9], 0
    // Predicated region
    $region2: #{tpu_custom_call.1} parent=1 // pred_check
      _
    $region3: #{tpu_custom_call.1} parent=1 // pred_check_branch
      %14 = sbr.rel (0) target = $region5
    $region4: #{tpu_custom_call.1} parent=1 // pred_region
      %s16 = ssub.s32 64, 64
      %17 = vsyncadd [#allocation3], %s16
      %s19 = sshll.u32 [#allocation2], 4
      %s20 = int_to_ptr.vmem [resolvable:$true] %s19
      %22 = dma.hbm_to_vmem [thread:$0]  %s0, 64, %s20, [#allocation3]
    $region5: #{tpu_custom_call.1} parent=1 // pred_fallthru
      _
    // Predicated region
    $region6: #{tpu_custom_call.1} parent=1 // pred_check
      _
    $region7: #{tpu_custom_call.1} parent=1 // pred_check_branch
      %24 = sbr.rel (0) target = $region9
    $region8: #{tpu_custom_call.1} parent=1 // pred_region
      %s26 = ssub.s32 128, 128
      %27 = vsyncadd [#allocation6], %s26
      %s29 = sshll.u32 [#allocation5], 4
      %s30 = int_to_ptr.vmem [resolvable:$true] %s29
      %32 = dma.hbm_to_vmem [thread:$0]  %s1, 128, %s30, [#allocation6]
    $region9: #{tpu_custom_call.1} parent=1 // pred_fallthru
      _
    // Predicated region
    $region10: #{tpu_custom_call.1} parent=1 // pred_check
      _
    $region11: #{tpu_custom_call.1} parent=1 // pred_check_branch
      %34 = sbr.rel (0) target = $region13
    $region12: #{tpu_custom_call.1} parent=1 // pred_region
      %35 = dma.done [#allocation3], 64
    $region13: #{tpu_custom_call.1} parent=1 // pred_fallthru
      _
    // Predicated region
    $region14: #{tpu_custom_call.1} parent=1 // pred_check
      _
    $region15: #{tpu_custom_call.1} parent=1 // pred_check_branch
      %37 = sbr.rel (0) target = $region17
    $region16: #{tpu_custom_call.1} parent=1 // pred_region
      %38 = dma.done [#allocation6], 128
    $region17: #{tpu_custom_call.1} parent=1 // pred_fallthru
      _
    %v39 = vld [vmem:[#allocation5] sm:$0x3f]
    %41 = vset.pattern.permute.xlu0 4
    %42 = vperm.xlu0 %41, %v39
    %v43 = vpop.permute.xlu0 %42
    %v45 = vld [vmem:[#allocation2] sm:$0x1]
    %46 = vset.pattern.permute.xlu0 0
    %47 = vperm.xlu0 %46, %v39
    %v48 = vpop.permute.xlu0 %47
    %v50 = vlaneseq
    %v51 = vshrl.u32 %v50, 7
    %v52 = vsub.s32 0, %v51
    %v53 = vrot.slane %v45, %v52
    %v54 = vmul.f32 %v48, %v53
    %v55 = vadd.f32 %v43, %v54
    %v56 = vld [vmem:[#allocation2 + $0x1] sm:$0x1]
    %57 = vset.pattern.permute.xlu0 1
    %58 = vperm.xlu0 %57, %v39
    %v59 = vpop.permute.xlu0 %58
    %v61 = vlaneseq
    %v62 = vshrl.u32 %v61, 7
    %v63 = vsub.s32 0, %v62
    %v64 = vrot.slane %v56, %v63
    %v65 = vmul.f32 %v59, %v64
    %v66 = vadd.f32 %v55, %v65
    %v67 = vld [vmem:[#allocation2 + $0x2] sm:$0x1]
    %68 = vset.pattern.permute.xlu0 2
    %69 = vperm.xlu0 %68, %v39
    %v70 = vpop.permute.xlu0 %69
    %v72 = vlaneseq
    %v73 = vshrl.u32 %v72, 7
    %v74 = vsub.s32 0, %v73
    %v75 = vrot.slane %v67, %v74
    %v76 = vmul.f32 %v70, %v75
    %v77 = vadd.f32 %v66, %v76
    %v78 = vld [vmem:[#allocation2 + $0x3] sm:$0x1]
    %79 = vset.pattern.permute.xlu0 3
    %80 = vperm.xlu0 %79, %v39
    %v81 = vpop.permute.xlu0 %80
    %v83 = vlaneseq
    %v84 = vshrl.u32 %v83, 7
    %v85 = vsub.s32 0, %v84
    %v86 = vrot.slane %v78, %v85
    %v87 = vmul.f32 %v81, %v86
    %v88 = vadd.f32 %v77, %v87
    %89 = vst [vmem:[#allocation7] sm:$0x3f] %v88
    %v90 = vmul.f32 %v88, 0.5
    %v91 = vtanh.pop %v90
    %v92 = vmul.f32 %v91, 0.5
    %v93 = vadd.f32 %v92, 0.5
    %94 = vst [vmem:[#allocation8] sm:$0x3f] %v93
    // Predicated region
    $region18: #{tpu_custom_call.1} parent=1 // pred_check
      _
    $region19: #{tpu_custom_call.1} parent=1 // pred_check_branch
      %96 = sbr.rel (0) target = $region21
    $region20: #{tpu_custom_call.1} parent=1 // pred_region
      %s98 = ssub.s32 128, 128
      %99 = vsyncadd [#allocation4], %s98
      %s101 = sshll.u32 [#allocation7], 4
      %s102 = int_to_ptr.vmem [resolvable:$true] %s101
      %104 = dma.vmem_to_hbm [thread:$0]  %s102, 128, %s2, [#allocation4]
    $region21: #{tpu_custom_call.1} parent=1 // pred_fallthru
      _
    // Predicated region
    $region22: #{tpu_custom_call.1} parent=1 // pred_check
      _
    $region23: #{tpu_custom_call.1} parent=1 // pred_check_branch
      %106 = sbr.rel (0) target = $region25
    $region24: #{tpu_custom_call.1} parent=1 // pred_region
      %s108 = ssub.s32 128, 128
      %109 = vsyncadd [#allocation9], %s108
      %s111 = sshll.u32 [#allocation8], 4
      %s112 = int_to_ptr.vmem [resolvable:$true] %s111
      %114 = dma.vmem_to_hbm [thread:$0]  %s112, 128, %s3, [#allocation9]
    $region25: #{tpu_custom_call.1} parent=1 // pred_fallthru
      _
    // Predicated region
    $region26: #{tpu_custom_call.1} parent=1 // pred_check
      _
    $region27: #{tpu_custom_call.1} parent=1 // pred_check_branch
      %116 = sbr.rel (0) target = $region29
    $region28: #{tpu_custom_call.1} parent=1 // pred_region
      %117 = dma.done [#allocation4], 128
    $region29: #{tpu_custom_call.1} parent=1 // pred_fallthru
      _
    // Predicated region
    $region30: #{tpu_custom_call.1} parent=1 // pred_check
      _
    $region31: #{tpu_custom_call.1} parent=1 // pred_check_branch
      %119 = sbr.rel (0) target = $region33
    $region32: #{tpu_custom_call.1} parent=1 // pred_region
      %120 = dma.done [#allocation9], 128
    $region33: #{tpu_custom_call.1} parent=1 // pred_fallthru
      _
    %121 = vsyncpa [#allocation3], 1
    %122 = vsyncpa [#allocation6], 1
    %123 = vsyncpa [#allocation4], 1
    %124 = vsyncpa [#allocation9], 1

</llo_original>
